<compile_context>
chip_gen: v7x
topology: tpu7x:2x2x1
jax: 0.10.0
libtpu: 0.0.40
codegen_flags: <defaults>
</compile_context>

<pallas_src>
import functools
import math

import jax
import jax.numpy as jnp
from jax import lax
from jax.experimental import pallas as pl
from jax.experimental.pallas import tpu as pltpu


def _maxpool_kernel(x_ref, o_ref, pad_ref, *, kh, kw, sh, sw, ho, wo,
                    top, bottom, left, right, h, w):
    """One grid step: one image x one channel block, channels-last.

    x_ref  : (H,  W,  CB) unpadded input slab   (VMEM)
    o_ref  : (Ho, Wo, CB) output slab           (VMEM)
    pad_ref: (Hp, Wp, CB) zero-padded scratch   (VMEM)
    """
    hp, wp, cb = pad_ref.shape
    zdt = pad_ref.dtype

    # Fused zero padding (F.pad with constant 0).  Only the border needs
    # zeroing — the interior is fully overwritten below every grid step.
    # Padded zeros participate in the max (module semantics).
    if top:
        pad_ref[pl.ds(0, top), :, :] = jnp.zeros((top, wp, cb), zdt)
    if bottom:
        pad_ref[pl.ds(top + h, bottom), :, :] = jnp.zeros((bottom, wp, cb), zdt)
    if left:
        pad_ref[:, pl.ds(0, left), :] = jnp.zeros((hp, left, cb), zdt)
    if right:
        pad_ref[:, pl.ds(left + w, right), :] = jnp.zeros((hp, right, cb), zdt)
    pad_ref[pl.ds(top, h), pl.ds(left, w), :] = x_ref[...]

    # kh*kw shifted + strided window reads.  Strides live on the leading (H)
    # and sublane (W) axes only; the lane axis (channels) stays contiguous,
    # so the final store is an unmasked lane-dense write.
    # Two-level reduction: row-max over kw, then max over kh rows.
    row_maxes = []
    for ih in range(kh):
        rm = pad_ref[pl.ds(ih, ho, stride=sh), pl.ds(0, wo, stride=sw), :]
        for iw in range(1, kw):
            win = pad_ref[pl.ds(ih, ho, stride=sh), pl.ds(iw, wo, stride=sw), :]
            rm = jnp.maximum(rm, win)
        row_maxes.append(rm)
    acc = row_maxes[0]
    for rm in row_maxes[1:]:
        acc = jnp.maximum(acc, rm)
    o_ref[...] = acc.astype(o_ref.dtype)


def _pick_channel_block(c, per_channel_bytes, budget_bytes):
    """Largest lane-dense channel block.

    Prefers a multiple of 128 that divides C and fits the VMEM budget
    (lane-dense blocks); falls back to the full C (block == full dim is always
    a legal BlockSpec) when C is not a multiple of 128.
    """
    if c % 128 == 0:
        best = 128
        m = 128
        while m <= c:
            if c % m == 0 and m * per_channel_bytes <= budget_bytes:
                best = m
            m += 128
        return best
    return c


def maxpool2d_same_padding(x, kernel_size=3, stride=2):
    if isinstance(kernel_size, int):
        kernel_size = (kernel_size, kernel_size)
    if isinstance(stride, int):
        stride = (stride, stride)
    kh, kw = kernel_size
    sh, sw = stride

    n, c, h, w = x.shape
    ho = math.ceil(h / sh)
    wo = math.ceil(w / sw)
    extra_h = (wo - 1) * sw - w + kw
    extra_v = (ho - 1) * sh - h + kh
    assert extra_h >= 0 and extra_v >= 0, "negative SAME padding not supported"
    left = extra_h // 2
    right = extra_h - left
    top = extra_v // 2
    bottom = extra_v - top
    hp = h + extra_v
    wp = w + extra_h

    # Channels-last so the lane (last) axis is C.  Layout plumbing is done by
    # XLA outside the kernel; the kernel itself never strides the lane axis.
    # TODO(synk): for layouts where W >= 128 a native-NCHW path (lane = W)
    # would skip the two XLA transposes; not taken here to keep one proven
    # lane-dense code path.
    xt = jnp.transpose(x, (0, 2, 3, 1))  # (N, H, W, C)

    itemsize = jnp.dtype(x.dtype).itemsize
    # Per-channel working set: double-buffered input + padded scratch +
    # double-buffered output.
    per_channel_bytes = itemsize * (2 * h * w + hp * wp + 2 * ho * wo)
    cb = _pick_channel_block(c, per_channel_bytes, budget_bytes=8 * 1024 * 1024)

    kernel = functools.partial(
        _maxpool_kernel,
        kh=kh, kw=kw, sh=sh, sw=sw, ho=ho, wo=wo,
        top=top, bottom=bottom, left=left, right=right, h=h, w=w,
    )
    cost = pl.CostEstimate(
        flops=n * c * ho * wo * kh * kw,        # max-comparisons
        transcendentals=0,
        bytes_accessed=itemsize * (n * c * h * w + n * c * ho * wo),
    )

    out = pl.pallas_call(
        kernel,
        out_shape=jax.ShapeDtypeStruct((n, ho, wo, c), x.dtype),
        grid=(n, c // cb),
        in_specs=[pl.BlockSpec((None, h, w, cb), lambda i, j: (i, 0, 0, j))],
        out_specs=pl.BlockSpec((None, ho, wo, cb), lambda i, j: (i, 0, 0, j)),
        scratch_shapes=[pltpu.VMEM((hp, wp, cb), x.dtype)],
        compiler_params=pltpu.CompilerParams(
            dimension_semantics=("parallel", "parallel"),
            vmem_limit_bytes=32 * 1024 * 1024,
        ),
        cost_estimate=cost,
    )(xt)

    return jnp.transpose(out, (0, 3, 1, 2))  # back to NCHW


def _reference(x, kernel_size=(3, 3), stride=(2, 2)):
    """Pure-JAX reference with identical semantics (zero pad, then VALID max pool)."""
    kh, kw = kernel_size
    sh, sw = stride
    n, c, h, w = x.shape
    ho, wo = math.ceil(h / sh), math.ceil(w / sw)
    extra_h = (wo - 1) * sw - w + kw
    extra_v = (ho - 1) * sh - h + kh
    left = extra_h // 2
    top = extra_v // 2
    xp = jnp.pad(
        x, ((0, 0), (0, 0), (top, extra_v - top), (left, extra_h - left))
    )
    return lax.reduce_window(
        xp, -jnp.inf, lax.max, (1, 1, kh, kw), (1, 1, sh, sw), "VALID"
    )


if __name__ == "__main__":
    key = jax.random.PRNGKey(0)

    # Case 1: small NCHW input matching the module's typical use (C < 128 path,
    # asymmetric SAME padding: top/left = 0, bottom/right = 1).
    x = jax.random.normal(key, (2, 4, 16, 16), dtype=jnp.float32)
    out = jax.block_until_ready(maxpool2d_same_padding(x, kernel_size=3, stride=2))
    ref = jax.block_until_ready(_reference(x))
    assert out.shape == (2, 4, 8, 8), out.shape
    assert jnp.allclose(out, ref), "mismatch vs reference (case 1)"

    # Case 2: lane-dense channel-blocked path (C multiple of 128) with odd/even
    # mixed spatial dims and asymmetric SAME padding.
    x2 = jax.random.normal(jax.random.PRNGKey(0), (1, 128, 15, 20), dtype=jnp.float32)
    out2 = jax.block_until_ready(maxpool2d_same_padding(x2, kernel_size=3, stride=2))
    ref2 = jax.block_until_ready(_reference(x2))
    assert out2.shape == (1, 128, 8, 10), out2.shape
    assert jnp.allclose(out2, ref2), "mismatch vs reference (case 2)"

    print("KERNEL_OK")
</pallas_src>

<mosaic_0001>
module attributes {stable_mosaic.version = 11 : i64} {
  func.func @_maxpool_kernel(%arg0: i32, %arg1: i32, %arg2: memref<1x16x16x4xf32, #tpu.memory_space<vmem>>, %arg3: memref<1x8x8x4xf32, #tpu.memory_space<vmem>>, %arg4: memref<17x17x4xf32, #tpu.memory_space<vmem>>) attributes {dimension_semantics = [#tpu.dimension_semantics<parallel>, #tpu.dimension_semantics<parallel>], iteration_bounds = array<i64: 2, 1>, scalar_prefetch = 0 : i64, scratch_operands = 1 : i64, tpu.core_type = #tpu.core_type<tc>, window_params = [{transform_indices = @transform_0, window_bounds = array<i64: 1, 16, 16, 4>}, {transform_indices = @transform_1, window_bounds = array<i64: 1, 8, 8, 4>}]} {
    %cst = arith.constant 0.000000e+00 : f32
    %0 = vector.broadcast %cst : f32 to vector<1x17x4xf32>
    %c16 = arith.constant 16 : index
    %c0 = arith.constant 0 : index
    %c0_0 = arith.constant 0 : index
    %1 = vector.load %arg4[%c16, %c0, %c0_0] : memref<17x17x4xf32, #tpu.memory_space<vmem>>, vector<1x17x4xf32>
    tpu.vector_store %arg4[%c16, %c0, %c0_0], %0 {strides = array<i32>} : memref<17x17x4xf32, #tpu.memory_space<vmem>>, vector<1x17x4xf32>,
    %cst_1 = arith.constant 0.000000e+00 : f32
    %2 = vector.broadcast %cst_1 : f32 to vector<17x1x4xf32>
    %c0_2 = arith.constant 0 : index
    %c16_3 = arith.constant 16 : index
    %c0_4 = arith.constant 0 : index
    %3 = vector.load %arg4[%c0_2, %c16_3, %c0_4] : memref<17x17x4xf32, #tpu.memory_space<vmem>>, vector<17x1x4xf32>
    tpu.vector_store %arg4[%c0_2, %c16_3, %c0_4], %2 {strides = array<i32>} : memref<17x17x4xf32, #tpu.memory_space<vmem>>, vector<17x1x4xf32>,
    %c0_5 = arith.constant 0 : index
    %c0_6 = arith.constant 0 : index
    %c0_7 = arith.constant 0 : index
    %c0_8 = arith.constant 0 : index
    %4 = vector.load %arg2[%c0_5, %c0_6, %c0_7, %c0_8] : memref<1x16x16x4xf32, #tpu.memory_space<vmem>>, vector<1x16x16x4xf32>
    %5 = vector.shape_cast %4 : vector<1x16x16x4xf32> to vector<16x16x4xf32>
    %c0_9 = arith.constant 0 : index
    %c0_10 = arith.constant 0 : index
    %c0_11 = arith.constant 0 : index
    %6 = vector.load %arg4[%c0_9, %c0_10, %c0_11] : memref<17x17x4xf32, #tpu.memory_space<vmem>>, vector<16x16x4xf32>
    tpu.vector_store %arg4[%c0_9, %c0_10, %c0_11], %5 {strides = array<i32>} : memref<17x17x4xf32, #tpu.memory_space<vmem>>, vector<16x16x4xf32>,
    %c0_12 = arith.constant 0 : index
    %c0_13 = arith.constant 0 : index
    %c0_14 = arith.constant 0 : index
    %7 = tpu.strided_load %arg4[%c0_12, %c0_13, %c0_14] {strides = array<i32: 2, 2, 1>} : memref<17x17x4xf32, #tpu.memory_space<vmem>>, vector<8x8x4xf32>
    %c0_15 = arith.constant 0 : index
    %c1 = arith.constant 1 : index
    %c0_16 = arith.constant 0 : index
    %8 = tpu.strided_load %arg4[%c0_15, %c1, %c0_16] {strides = array<i32: 2, 2, 1>} : memref<17x17x4xf32, #tpu.memory_space<vmem>>, vector<8x8x4xf32>
    %9 = arith.maximumf %7, %8 : vector<8x8x4xf32>
    %c0_17 = arith.constant 0 : index
    %c2 = arith.constant 2 : index
    %c0_18 = arith.constant 0 : index
    %10 = tpu.strided_load %arg4[%c0_17, %c2, %c0_18] {strides = array<i32: 2, 2, 1>} : memref<17x17x4xf32, #tpu.memory_space<vmem>>, vector<8x8x4xf32>
    %11 = arith.maximumf %9, %10 : vector<8x8x4xf32>
    %c1_19 = arith.constant 1 : index
    %c0_20 = arith.constant 0 : index
    %c0_21 = arith.constant 0 : index
    %12 = tpu.strided_load %arg4[%c1_19, %c0_20, %c0_21] {strides = array<i32: 2, 2, 1>} : memref<17x17x4xf32, #tpu.memory_space<vmem>>, vector<8x8x4xf32>
    %c1_22 = arith.constant 1 : index
    %c1_23 = arith.constant 1 : index
    %c0_24 = arith.constant 0 : index
    %13 = tpu.strided_load %arg4[%c1_22, %c1_23, %c0_24] {strides = array<i32: 2, 2, 1>} : memref<17x17x4xf32, #tpu.memory_space<vmem>>, vector<8x8x4xf32>
    %14 = arith.maximumf %12, %13 : vector<8x8x4xf32>
    %c1_25 = arith.constant 1 : index
    %c2_26 = arith.constant 2 : index
    %c0_27 = arith.constant 0 : index
    %15 = tpu.strided_load %arg4[%c1_25, %c2_26, %c0_27] {strides = array<i32: 2, 2, 1>} : memref<17x17x4xf32, #tpu.memory_space<vmem>>, vector<8x8x4xf32>
    %16 = arith.maximumf %14, %15 : vector<8x8x4xf32>
    %c2_28 = arith.constant 2 : index
    %c0_29 = arith.constant 0 : index
    %c0_30 = arith.constant 0 : index
    %17 = tpu.strided_load %arg4[%c2_28, %c0_29, %c0_30] {strides = array<i32: 2, 2, 1>} : memref<17x17x4xf32, #tpu.memory_space<vmem>>, vector<8x8x4xf32>
    %c2_31 = arith.constant 2 : index
    %c1_32 = arith.constant 1 : index
    %c0_33 = arith.constant 0 : index
    %18 = tpu.strided_load %arg4[%c2_31, %c1_32, %c0_33] {strides = array<i32: 2, 2, 1>} : memref<17x17x4xf32, #tpu.memory_space<vmem>>, vector<8x8x4xf32>
    %19 = arith.maximumf %17, %18 : vector<8x8x4xf32>
    %c2_34 = arith.constant 2 : index
    %c2_35 = arith.constant 2 : index
    %c0_36 = arith.constant 0 : index
    %20 = tpu.strided_load %arg4[%c2_34, %c2_35, %c0_36] {strides = array<i32: 2, 2, 1>} : memref<17x17x4xf32, #tpu.memory_space<vmem>>, vector<8x8x4xf32>
    %21 = arith.maximumf %19, %20 : vector<8x8x4xf32>
    %22 = arith.maximumf %11, %16 : vector<8x8x4xf32>
    %23 = arith.maximumf %22, %21 : vector<8x8x4xf32>
    %c0_37 = arith.constant 0 : index
    %c0_38 = arith.constant 0 : index
    %c0_39 = arith.constant 0 : index
    %c0_40 = arith.constant 0 : index
    %24 = vector.load %arg3[%c0_37, %c0_38, %c0_39, %c0_40] : memref<1x8x8x4xf32, #tpu.memory_space<vmem>>, vector<1x8x8x4xf32>
    %25 = vector.shape_cast %24 : vector<1x8x8x4xf32> to vector<8x8x4xf32>
    %26 = vector.shape_cast %23 : vector<8x8x4xf32> to vector<1x8x8x4xf32>
    tpu.vector_store %arg3[%c0_37, %c0_38, %c0_39, %c0_40], %26 {strides = array<i32>} : memref<1x8x8x4xf32, #tpu.memory_space<vmem>>, vector<1x8x8x4xf32>,
    return
  }
  func.func @transform_0(%arg0: i32, %arg1: i32) -> (i32, i32, i32, i32) {
    %c0_i32 = arith.constant 0 : i32
    %c0_i32_0 = arith.constant 0 : i32
    %c0_i32_1 = arith.constant 0 : i32
    return %arg0, %c0_i32, %c0_i32_0, %arg1 : i32, i32, i32, i32
  }
  func.func @transform_1(%arg0: i32, %arg1: i32) -> (i32, i32, i32, i32) {
    %c0_i32 = arith.constant 0 : i32
    %c0_i32_0 = arith.constant 0 : i32
    %c0_i32_1 = arith.constant 0 : i32
    return %arg0, %c0_i32, %c0_i32_0, %arg1 : i32, i32, i32, i32
  }
}

</mosaic_0001>

<llo_original>
// kernel: tpu_custom_call.1
$region0: #{tpu_custom_call.1}
  #allocation0 [shape = 'u32[]', space=smem, size = 0x4, offset = 0x4, fixed_abs, tag = 'smem constant byte address 0x4 - core index']
  #allocation1 [shape = 'u32[144,128]{1,0:T(1,128)}', space=vmem, size = 0x12000, scoped, tag = 'internal scratch']
  #allocation2 [shape = 'f32[17,17,4]{2,1,0:T(8,128)}', space=vmem, size = 0x33000, scoped, tag = 'scratch operand']
  %s0 = inlined_call_operand.vmem [shape: f32[2,16,16,4], index: 0, kind: input, shape index: {}]
  %s1 = inlined_call_operand.vmem [shape: f32[2,8,8,4], index: 1, kind: output, shape index: {}]
  %s2 = sld [smem:[#allocation0]]
  $region37: #{tpu_custom_call.1} parent=0
    _
  %s4 = ssub.s32 1, %s2
  %s5 = scalar_select 0, %s4, %s2
  loop: start=0, step=1, limit=4
  $region2: #{tpu_custom_call.1} parent=0 // loop_pre_header
    _
  $region3: #{tpu_custom_call.1} parent=0 // loop_header
    %s7 = sphi 0, %s11
    %p8 = scmp.ge.s32.totalorder %s7, 4
    %s14 = sphi 0, %s26
    %s15 = sphi 0, %s22
    %s16 = sphi 0, %s14
    %s17 = sphi 0, %s15
    %s18 = sphi 0, %s16
    %s19 = sphi 0, %s17
    %s31 = sphi 0, %s33
    %s34 = sphi 0, %s31
    %s35 = sphi 0, %s34
    %s51 = sphi 0, %s35
    %s59 = sphi 0, %s61
    %s62 = sphi 0, %s59
    %s63 = sphi 0, %s62
    %s79 = sphi 0, %s63
  $region4: #{tpu_custom_call.1} parent=0 // loop_header_branch
    %10 = sbr.rel (%p8) target = $region8
  $region5: #{tpu_custom_call.1} parent=0 // loop_body
    %s12 = ssub.s32 %s7, 1
    %s13 = ssub.s32 %s7, 2
    %s20 = sadd.s32 1, %s15
    %p21 = scmp.ge.s32.totalorder %s20, 1
    %s22 = scalar_select %p21, 0, %s20
    %s23 = sadd.s32 1, %s14
    %s24 = scalar_select %p21, %s23, %s14
    %p25 = scmp.ge.s32.totalorder %s24, 2
    %s26 = scalar_select %p25, 0, %s24
    %s27 = ssub.s32 %s14, %s26
    %s28 = ssub.s32 %s15, %s22
    %s29 = sor.u32 %s27, %s28
    %p30 = scmp.eq.s32.totalorder %s29, 0
    %s32 = sadd.s32 %s31, 1
    %s33 = scalar_select %p30, %s31, %s32
    %p36 = pneg %p30
    %p37 = scmp.eq.s32.totalorder %s7, 1
    %p38 = por %p36, %p37
    %p39 = scmp.ne.s32.totalorder %s31, %s34
    %p40 = scmp.eq.s32.totalorder %s7, 0
    %p41 = por %p39, %p40
    %p42 = scmp.ne.s32.totalorder %s31, %s34
    %p43 = scmp.eq.s32.totalorder %s12, 1
    %p44 = por %p42, %p43
    %p45 = scmp.ne.s32.totalorder %s34, %s35
    %p46 = scmp.eq.s32.totalorder %s12, 0
    %p47 = por %p45, %p46
    %p48 = scmp.ne.s32.totalorder %s34, %s35
    %p49 = scmp.eq.s32.totalorder %s13, 1
    %p50 = por %p48, %p49
    %p52 = scmp.ne.s32.totalorder %s35, %s51
    %p53 = scmp.eq.s32.totalorder %s13, 0
    %p54 = por %p52, %p53
    %s55 = ssub.s32 %s14, %s26
    %s56 = ssub.s32 %s15, %s22
    %s57 = sor.u32 %s55, %s56
    %p58 = scmp.eq.s32.totalorder %s57, 0
    %s60 = sadd.s32 %s59, 1
    %s61 = scalar_select %p58, %s59, %s60
    %p64 = pneg %p58
    %p65 = scmp.eq.s32.totalorder %s7, 1
    %p66 = por %p64, %p65
    %p67 = scmp.ne.s32.totalorder %s59, %s62
    %p68 = scmp.eq.s32.totalorder %s7, 0
    %p69 = por %p67, %p68
    %p70 = scmp.ne.s32.totalorder %s59, %s62
    %p71 = scmp.eq.s32.totalorder %s12, 1
    %p72 = por %p70, %p71
    %p73 = scmp.ne.s32.totalorder %s62, %s63
    %p74 = scmp.eq.s32.totalorder %s12, 0
    %p75 = por %p73, %p74
    %p76 = scmp.ne.s32.totalorder %s62, %s63
    %p77 = scmp.eq.s32.totalorder %s13, 1
    %p78 = por %p76, %p77
    %p80 = scmp.ne.s32.totalorder %s63, %s79
    %p81 = scmp.eq.s32.totalorder %s13, 0
    %p82 = por %p80, %p81
    %p83 = scmp.le.s32.totalorder 1, %s7
    %p84 = scmp.lt.s32.totalorder %s7, 3
    %p85 = pnand %p83, %p84
    %p86 = pneg %p85
    // Predicated region
    $region9: #{tpu_custom_call.1} parent=5 // pred_check
      _
    $region10: #{tpu_custom_call.1} parent=5 // pred_check_branch
      %88 = sbr.rel (%p85) target = $region12
    $region11: #{tpu_custom_call.1} parent=5 // pred_region
      %s89 = ssub.s32 %s7, 1
    $region12: #{tpu_custom_call.1} parent=5 // pred_fallthru
      _
    %p90 = scmp.lt.s32.totalorder %s7, 2
    // Predicated region
    $region13: #{tpu_custom_call.1} parent=5 // pred_check
      %p91 = pneg %p90
    $region14: #{tpu_custom_call.1} parent=5 // pred_check_branch
      %93 = sbr.rel (%p91) target = $region16
    $region15: #{tpu_custom_call.1} parent=5 // pred_region
      // Predicated region
      $region17: #{tpu_custom_call.1} parent=15 // pred_check
        %p94 = pneg %p41
      $region18: #{tpu_custom_call.1} parent=15 // pred_check_branch
        %96 = sbr.rel (%p94) target = $region20
      $region19: #{tpu_custom_call.1} parent=15 // pred_region
        %p97 = scmp.lt.s32.totalorder %s14, 1
        %s98 = scalar_select %p97, %s14, 1
        %p99 = scmp.lt.s32.totalorder %s15, 0
        %s100 = scalar_select %p99, %s15, 0
        %s101 = smul.addr %s98, 32
        %s102 = sadd.s32 %s100, %s101
        %s103 = smul.addr %s102, 8
        %s104 = scalar_lea.vmem %s0, %s103
      $region20: #{tpu_custom_call.1} parent=15 // pred_fallthru
        _
    $region16: #{tpu_custom_call.1} parent=5 // pred_fallthru
      _
    %p105 = scmp.le.s32.totalorder 1, %s7
    %p106 = scmp.lt.s32.totalorder %s7, 3
    %p107 = pnand %p105, %p106
    %p108 = pneg %p107
    // Predicated region
    $region21: #{tpu_custom_call.1} parent=5 // pred_check
      _
    $region22: #{tpu_custom_call.1} parent=5 // pred_check_branch
      %110 = sbr.rel (%p107) target = $region24
    $region23: #{tpu_custom_call.1} parent=5 // pred_region
      %s111 = ssub.s32 %s7, 1
      %p112 = scmp.lt.s32.totalorder %s16, 1
      %s113 = scalar_select %p112, %s16, 1
      %p114 = scmp.lt.s32.totalorder %s17, 0
      %s115 = scalar_select %p114, %s17, 0
      %s116 = smul.addr %s113, 32
      %s117 = sadd.s32 %s115, %s116
      %s118 = smul.addr %s117, 8
      %s119 = scalar_lea.vmem %s0, %s118
      %p120 = pneg %p47
      %p121 = pneg %p44
      %p122 = pneg %p75
      %p123 = pneg %p72
      %p124 = scmp.lt.s32.totalorder %s16, 1
      %s125 = scalar_select %p124, %s16, 1
      %p126 = scmp.lt.s32.totalorder %s17, 0
      %s127 = scalar_select %p126, %s17, 0
      %s128 = smul.addr %s125, 8
      %s129 = sadd.s32 %s127, %s128
      %s130 = smul.addr %s129, 8
      %s131 = scalar_lea.vmem %s1, %s130
      %p132 = scmp.lt.s32.totalorder %s16, 1
      %s133 = scalar_select %p132, %s16, 1
      %p134 = scmp.lt.s32.totalorder %s17, 0
      %s135 = scalar_select %p134, %s17, 0
      %s136 = smul.addr %s133, 32
      %s137 = sadd.s32 %s135, %s136
      %s138 = smul.addr %s137, 8
      %s139 = scalar_lea.vmem %s0, %s138
      %p140 = scmp.lt.s32.totalorder %s16, 1
      %s141 = scalar_select %p140, %s16, 1
      %p142 = scmp.lt.s32.totalorder %s17, 0
      %s143 = scalar_select %p142, %s17, 0
      %s144 = smul.addr %s141, 8
      %s145 = sadd.s32 %s143, %s144
      %s146 = smul.addr %s145, 8
      %s147 = scalar_lea.vmem %s1, %s146
      %s148 = scalar_lea.vmem [#allocation2], 384
      %vm149 = vcmask 31744
      %150 = vst.msk [vmem:[%s148] sm:$0xff] %vm149, 0.0
      %151 = vst.msk [vmem:[%s148 + $0x8] sm:$0xff] %vm149, 0.0
      %vm152 = vcmask 24576
      %153 = vst.msk [vmem:[%s148 + $0x10] sm:$0x1] %vm152, 0.0
      %154 = vst.msk [vmem:[#allocation2 + $0x10] sm:$0x1] %vm152, 0.0
      %155 = vst.msk [vmem:[#allocation2 + $0x28] sm:$0x1] %vm152, 0.0
      %156 = vst.msk [vmem:[#allocation2 + $0x40] sm:$0x1] %vm152, 0.0
      %157 = vst.msk [vmem:[#allocation2 + $0x58] sm:$0x1] %vm152, 0.0
      %158 = vst.msk [vmem:[#allocation2 + $0x70] sm:$0x1] %vm152, 0.0
      %159 = vst.msk [vmem:[#allocation2 + $0x88] sm:$0x1] %vm152, 0.0
      %160 = vst.msk [vmem:[#allocation2 + $0xa0] sm:$0x1] %vm152, 0.0
      %161 = vst.msk [vmem:[#allocation2 + $0xb8] sm:$0x1] %vm152, 0.0
      %162 = vst.msk [vmem:[#allocation2 + $0xd0] sm:$0x1] %vm152, 0.0
      %163 = vst.msk [vmem:[#allocation2 + $0xe8] sm:$0x1] %vm152, 0.0
      %164 = vst.msk [vmem:[#allocation2 + $0x100] sm:$0x1] %vm152, 0.0
      %165 = vst.msk [vmem:[#allocation2 + $0x118] sm:$0x1] %vm152, 0.0
      %166 = vst.msk [vmem:[#allocation2 + $0x130] sm:$0x1] %vm152, 0.0
      %167 = vst.msk [vmem:[#allocation2 + $0x148] sm:$0x1] %vm152, 0.0
      %168 = vst.msk [vmem:[#allocation2 + $0x160] sm:$0x1] %vm152, 0.0
      %169 = vst.msk [vmem:[#allocation2 + $0x178] sm:$0x1] %vm152, 0.0
      %170 = vst.msk [vmem:[#allocation2 + $0x190] sm:$0x1] %vm152, 0.0
      %v171 = vld [vmem:[%s139] sm:$0xff]
      %v172 = vld [vmem:[%s139 + $0x8] sm:$0xff]
      %v173 = vld [vmem:[%s139 + $0x10] sm:$0xff]
      %v174 = vld [vmem:[%s139 + $0x18] sm:$0xff]
      %v175 = vld [vmem:[%s139 + $0x20] sm:$0xff]
      %v176 = vld [vmem:[%s139 + $0x28] sm:$0xff]
      %v177 = vld [vmem:[%s139 + $0x30] sm:$0xff]
      %v178 = vld [vmem:[%s139 + $0x38] sm:$0xff]
      %v179 = vld [vmem:[%s139 + $0x40] sm:$0xff]
      %v180 = vld [vmem:[%s139 + $0x48] sm:$0xff]
      %v181 = vld [vmem:[%s139 + $0x50] sm:$0xff]
      %v182 = vld [vmem:[%s139 + $0x58] sm:$0xff]
      %v183 = vld [vmem:[%s139 + $0x60] sm:$0xff]
      %v184 = vld [vmem:[%s139 + $0x68] sm:$0xff]
      %v185 = vld [vmem:[%s139 + $0x70] sm:$0xff]
      %v186 = vld [vmem:[%s139 + $0x78] sm:$0xff]
      %v187 = vld [vmem:[%s139 + $0x80] sm:$0xff]
      %v188 = vld [vmem:[%s139 + $0x88] sm:$0xff]
      %v189 = vld [vmem:[%s139 + $0x90] sm:$0xff]
      %v190 = vld [vmem:[%s139 + $0x98] sm:$0xff]
      %v191 = vld [vmem:[%s139 + $0xa0] sm:$0xff]
      %v192 = vld [vmem:[%s139 + $0xa8] sm:$0xff]
      %v193 = vld [vmem:[%s139 + $0xb0] sm:$0xff]
      %v194 = vld [vmem:[%s139 + $0xb8] sm:$0xff]
      %v195 = vld [vmem:[%s139 + $0xc0] sm:$0xff]
      %v196 = vld [vmem:[%s139 + $0xc8] sm:$0xff]
      %v197 = vld [vmem:[%s139 + $0xd0] sm:$0xff]
      %v198 = vld [vmem:[%s139 + $0xd8] sm:$0xff]
      %v199 = vld [vmem:[%s139 + $0xe0] sm:$0xff]
      %v200 = vld [vmem:[%s139 + $0xe8] sm:$0xff]
      %v201 = vld [vmem:[%s139 + $0xf0] sm:$0xff]
      %v202 = vld [vmem:[%s139 + $0xf8] sm:$0xff]
      %203 = vst.msk [vmem:[#allocation2] sm:$0xff] %vm149, %v171
      %204 = vst.msk [vmem:[#allocation2 + $0x8] sm:$0xff] %vm149, %v172
      %205 = vst.msk [vmem:[#allocation2 + $0x18] sm:$0xff] %vm149, %v173
      %206 = vst.msk [vmem:[#allocation2 + $0x20] sm:$0xff] %vm149, %v174
      %207 = vst.msk [vmem:[#allocation2 + $0x30] sm:$0xff] %vm149, %v175
      %208 = vst.msk [vmem:[#allocation2 + $0x38] sm:$0xff] %vm149, %v176
      %209 = vst.msk [vmem:[#allocation2 + $0x48] sm:$0xff] %vm149, %v177
      %210 = vst.msk [vmem:[#allocation2 + $0x50] sm:$0xff] %vm149, %v178
      %211 = vst.msk [vmem:[#allocation2 + $0x60] sm:$0xff] %vm149, %v179
      %212 = vst.msk [vmem:[#allocation2 + $0x68] sm:$0xff] %vm149, %v180
      %213 = vst.msk [vmem:[#allocation2 + $0x78] sm:$0xff] %vm149, %v181
      %214 = vst.msk [vmem:[#allocation2 + $0x80] sm:$0xff] %vm149, %v182
      %215 = vst.msk [vmem:[#allocation2 + $0x90] sm:$0xff] %vm149, %v183
      %216 = vst.msk [vmem:[#allocation2 + $0x98] sm:$0xff] %vm149, %v184
      %217 = vst.msk [vmem:[#allocation2 + $0xa8] sm:$0xff] %vm149, %v185
      %218 = vst.msk [vmem:[#allocation2 + $0xb0] sm:$0xff] %vm149, %v186
      %219 = vst.msk [vmem:[#allocation2 + $0xc0] sm:$0xff] %vm149, %v187
      %220 = vst.msk [vmem:[#allocation2 + $0xc8] sm:$0xff] %vm149, %v188
      %221 = vst.msk [vmem:[#allocation2 + $0xd8] sm:$0xff] %vm149, %v189
      %222 = vst.msk [vmem:[#allocation2 + $0xe0] sm:$0xff] %vm149, %v190
      %223 = vst.msk [vmem:[#allocation2 + $0xf0] sm:$0xff] %vm149, %v191
      %224 = vst.msk [vmem:[#allocation2 + $0xf8] sm:$0xff] %vm149, %v192
      %225 = vst.msk [vmem:[#allocation2 + $0x108] sm:$0xff] %vm149, %v193
      %226 = vst.msk [vmem:[#allocation2 + $0x110] sm:$0xff] %vm149, %v194
      %227 = vst.msk [vmem:[#allocation2 + $0x120] sm:$0xff] %vm149, %v195
      %228 = vst.msk [vmem:[#allocation2 + $0x128] sm:$0xff] %vm149, %v196
      %229 = vst.msk [vmem:[#allocation2 + $0x138] sm:$0xff] %vm149, %v197
      %230 = vst.msk [vmem:[#allocation2 + $0x140] sm:$0xff] %vm149, %v198
      %231 = vst.msk [vmem:[#allocation2 + $0x150] sm:$0xff] %vm149, %v199
      %232 = vst.msk [vmem:[#allocation2 + $0x158] sm:$0xff] %vm149, %v200
      %233 = vst.msk [vmem:[#allocation2 + $0x168] sm:$0xff] %vm149, %v201
      %234 = vst.msk [vmem:[#allocation2 + $0x170] sm:$0xff] %vm149, %v202
      %v235 = vld [vmem:[#allocation2] ss:$2 sm:$0xff]
      %s236 = scalar_lea.vmem [#allocation2], 48
      %v237 = vld [vmem:[%s236] ss:$2 sm:$0xff]
      %s238 = scalar_lea.vmem [#allocation2], 96
      %v239 = vld [vmem:[%s238] ss:$2 sm:$0xff]
      %s240 = scalar_lea.vmem [#allocation2], 144
      %v241 = vld [vmem:[%s240] ss:$2 sm:$0xff]
      %s242 = scalar_lea.vmem [#allocation2], 192
      %v243 = vld [vmem:[%s242] ss:$2 sm:$0xff]
      %s244 = scalar_lea.vmem [#allocation2], 240
      %v245 = vld [vmem:[%s244] ss:$2 sm:$0xff]
      %s246 = scalar_lea.vmem [#allocation2], 288
      %v247 = vld [vmem:[%s246] ss:$2 sm:$0xff]
      %s248 = scalar_lea.vmem [#allocation2], 336
      %v249 = vld [vmem:[%s248] ss:$2 sm:$0xff]
      %s250 = scalar_lea.vmem [#allocation2], 1
      %v251 = vld [vmem:[%s250] ss:$2 sm:$0xff]
      %s252 = scalar_lea.vmem [#allocation2], 49
      %v253 = vld [vmem:[%s252] ss:$2 sm:$0xff]
      %s254 = scalar_lea.vmem [#allocation2], 97
      %v255 = vld [vmem:[%s254] ss:$2 sm:$0xff]
      %s256 = scalar_lea.vmem [#allocation2], 145
      %v257 = vld [vmem:[%s256] ss:$2 sm:$0xff]
      %s258 = scalar_lea.vmem [#allocation2], 193
      %v259 = vld [vmem:[%s258] ss:$2 sm:$0xff]
      %s260 = scalar_lea.vmem [#allocation2], 241
      %v261 = vld [vmem:[%s260] ss:$2 sm:$0xff]
      %s262 = scalar_lea.vmem [#allocation2], 289
      %v263 = vld [vmem:[%s262] ss:$2 sm:$0xff]
      %s264 = scalar_lea.vmem [#allocation2], 337
      %v265 = vld [vmem:[%s264] ss:$2 sm:$0xff]
      %v266 = vmax.f32 %v235, %v251
      %v267 = vmax.f32 %v237, %v253
      %v268 = vmax.f32 %v239, %v255
      %v269 = vmax.f32 %v241, %v257
      %v270 = vmax.f32 %v243, %v259
      %v271 = vmax.f32 %v245, %v261
      %v272 = vmax.f32 %v247, %v263
      %v273 = vmax.f32 %v249, %v265
      %s274 = scalar_lea.vmem [#allocation2], 2
      %v275 = vld [vmem:[%s274] ss:$2 sm:$0xff]
      %s276 = scalar_lea.vmem [#allocation2], 50
      %v277 = vld [vmem:[%s276] ss:$2 sm:$0xff]
      %s278 = scalar_lea.vmem [#allocation2], 98
      %v279 = vld [vmem:[%s278] ss:$2 sm:$0xff]
      %s280 = scalar_lea.vmem [#allocation2], 146
      %v281 = vld [vmem:[%s280] ss:$2 sm:$0xff]
      %s282 = scalar_lea.vmem [#allocation2], 194
      %v283 = vld [vmem:[%s282] ss:$2 sm:$0xff]
      %s284 = scalar_lea.vmem [#allocation2], 242
      %v285 = vld [vmem:[%s284] ss:$2 sm:$0xff]
      %s286 = scalar_lea.vmem [#allocation2], 290
      %v287 = vld [vmem:[%s286] ss:$2 sm:$0xff]
      %s288 = scalar_lea.vmem [#allocation2], 338
      %v289 = vld [vmem:[%s288] ss:$2 sm:$0xff]
      %v290 = vmax.f32 %v266, %v275
      %v291 = vmax.f32 %v267, %v277
      %v292 = vmax.f32 %v268, %v279
      %v293 = vmax.f32 %v269, %v281
      %v294 = vmax.f32 %v270, %v283
      %v295 = vmax.f32 %v271, %v285
      %v296 = vmax.f32 %v272, %v287
      %v297 = vmax.f32 %v273, %v289
      %s298 = scalar_lea.vmem [#allocation2], 24
      %v299 = vld [vmem:[%s298] ss:$2 sm:$0xff]
      %s300 = scalar_lea.vmem %s298, 48 [#allocation2]
      %v301 = vld [vmem:[%s300] ss:$2 sm:$0xff]
      %s302 = scalar_lea.vmem %s298, 96 [#allocation2]
      %v303 = vld [vmem:[%s302] ss:$2 sm:$0xff]
      %s304 = scalar_lea.vmem %s298, 144 [#allocation2]
      %v305 = vld [vmem:[%s304] ss:$2 sm:$0xff]
      %s306 = scalar_lea.vmem %s298, 192 [#allocation2]
      %v307 = vld [vmem:[%s306] ss:$2 sm:$0xff]
      %s308 = scalar_lea.vmem %s298, 240 [#allocation2]
      %v309 = vld [vmem:[%s308] ss:$2 sm:$0xff]
      %s310 = scalar_lea.vmem %s298, 288 [#allocation2]
      %v311 = vld [vmem:[%s310] ss:$2 sm:$0xff]
      %s312 = scalar_lea.vmem %s298, 336 [#allocation2]
      %v313 = vld [vmem:[%s312] ss:$2 sm:$0xff]
      %s314 = scalar_lea.vmem %s298, 1 [#allocation2]
      %v315 = vld [vmem:[%s314] ss:$2 sm:$0xff]
      %s316 = scalar_lea.vmem %s298, 49 [#allocation2]
      %v317 = vld [vmem:[%s316] ss:$2 sm:$0xff]
      %s318 = scalar_lea.vmem %s298, 97 [#allocation2]
      %v319 = vld [vmem:[%s318] ss:$2 sm:$0xff]
      %s320 = scalar_lea.vmem %s298, 145 [#allocation2]
      %v321 = vld [vmem:[%s320] ss:$2 sm:$0xff]
      %s322 = scalar_lea.vmem %s298, 193 [#allocation2]
      %v323 = vld [vmem:[%s322] ss:$2 sm:$0xff]
      %s324 = scalar_lea.vmem %s298, 241 [#allocation2]
      %v325 = vld [vmem:[%s324] ss:$2 sm:$0xff]
      %s326 = scalar_lea.vmem %s298, 289 [#allocation2]
      %v327 = vld [vmem:[%s326] ss:$2 sm:$0xff]
      %s328 = scalar_lea.vmem %s298, 337 [#allocation2]
      %v329 = vld [vmem:[%s328] ss:$2 sm:$0xff]
      %v330 = vmax.f32 %v299, %v315
      %v331 = vmax.f32 %v301, %v317
      %v332 = vmax.f32 %v303, %v319
      %v333 = vmax.f32 %v305, %v321
      %v334 = vmax.f32 %v307, %v323
      %v335 = vmax.f32 %v309, %v325
      %v336 = vmax.f32 %v311, %v327
      %v337 = vmax.f32 %v313, %v329
      %s338 = scalar_lea.vmem %s298, 2 [#allocation2]
      %v339 = vld [vmem:[%s338] ss:$2 sm:$0xff]
      %s340 = scalar_lea.vmem %s298, 50 [#allocation2]
      %v341 = vld [vmem:[%s340] ss:$2 sm:$0xff]
      %s342 = scalar_lea.vmem %s298, 98 [#allocation2]
      %v343 = vld [vmem:[%s342] ss:$2 sm:$0xff]
      %s344 = scalar_lea.vmem %s298, 146 [#allocation2]
      %v345 = vld [vmem:[%s344] ss:$2 sm:$0xff]
      %s346 = scalar_lea.vmem %s298, 194 [#allocation2]
      %v347 = vld [vmem:[%s346] ss:$2 sm:$0xff]
      %s348 = scalar_lea.vmem %s298, 242 [#allocation2]
      %v349 = vld [vmem:[%s348] ss:$2 sm:$0xff]
      %s350 = scalar_lea.vmem %s298, 290 [#allocation2]
      %v351 = vld [vmem:[%s350] ss:$2 sm:$0xff]
      %s352 = scalar_lea.vmem %s298, 338 [#allocation2]
      %v353 = vld [vmem:[%s352] ss:$2 sm:$0xff]
      %v354 = vmax.f32 %v330, %v339
      %v355 = vmax.f32 %v331, %v341
      %v356 = vmax.f32 %v332, %v343
      %v357 = vmax.f32 %v333, %v345
      %v358 = vmax.f32 %v334, %v347
      %v359 = vmax.f32 %v335, %v349
      %v360 = vmax.f32 %v336, %v351
      %v361 = vmax.f32 %v337, %v353
      %s362 = scalar_lea.vmem [#allocation2], 48
      %v363 = vld [vmem:[%s362] ss:$2 sm:$0xff]
      %s364 = scalar_lea.vmem %s362, 48 [#allocation2]
      %v365 = vld [vmem:[%s364] ss:$2 sm:$0xff]
      %s366 = scalar_lea.vmem %s362, 96 [#allocation2]
      %v367 = vld [vmem:[%s366] ss:$2 sm:$0xff]
      %s368 = scalar_lea.vmem %s362, 144 [#allocation2]
      %v369 = vld [vmem:[%s368] ss:$2 sm:$0xff]
      %s370 = scalar_lea.vmem %s362, 192 [#allocation2]
      %v371 = vld [vmem:[%s370] ss:$2 sm:$0xff]
      %s372 = scalar_lea.vmem %s362, 240 [#allocation2]
      %v373 = vld [vmem:[%s372] ss:$2 sm:$0xff]
      %s374 = scalar_lea.vmem %s362, 288 [#allocation2]
      %v375 = vld [vmem:[%s374] ss:$2 sm:$0xff]
      %s376 = scalar_lea.vmem %s362, 336 [#allocation2]
      %v377 = vld [vmem:[%s376] ss:$2 sm:$0xff]
      %s378 = scalar_lea.vmem %s362, 1 [#allocation2]
      %v379 = vld [vmem:[%s378] ss:$2 sm:$0xff]
      %s380 = scalar_lea.vmem %s362, 49 [#allocation2]
      %v381 = vld [vmem:[%s380] ss:$2 sm:$0xff]
      %s382 = scalar_lea.vmem %s362, 97 [#allocation2]
      %v383 = vld [vmem:[%s382] ss:$2 sm:$0xff]
      %s384 = scalar_lea.vmem %s362, 145 [#allocation2]
      %v385 = vld [vmem:[%s384] ss:$2 sm:$0xff]
      %s386 = scalar_lea.vmem %s362, 193 [#allocation2]
      %v387 = vld [vmem:[%s386] ss:$2 sm:$0xff]
      %s388 = scalar_lea.vmem %s362, 241 [#allocation2]
      %v389 = vld [vmem:[%s388] ss:$2 sm:$0xff]
      %s390 = scalar_lea.vmem %s362, 289 [#allocation2]
      %v391 = vld [vmem:[%s390] ss:$2 sm:$0xff]
      %s392 = scalar_lea.vmem %s362, 337 [#allocation2]
      %v393 = vld [vmem:[%s392] ss:$2 sm:$0xff]
      %v394 = vmax.f32 %v363, %v379
      %v395 = vmax.f32 %v365, %v381
      %v396 = vmax.f32 %v367, %v383
      %v397 = vmax.f32 %v369, %v385
      %v398 = vmax.f32 %v371, %v387
      %v399 = vmax.f32 %v373, %v389
      %v400 = vmax.f32 %v375, %v391
      %v401 = vmax.f32 %v377, %v393
      %s402 = scalar_lea.vmem %s362, 2 [#allocation2]
      %v403 = vld [vmem:[%s402] ss:$2 sm:$0xff]
      %s404 = scalar_lea.vmem %s362, 50 [#allocation2]
      %v405 = vld [vmem:[%s404] ss:$2 sm:$0xff]
      %s406 = scalar_lea.vmem %s362, 98 [#allocation2]
      %v407 = vld [vmem:[%s406] ss:$2 sm:$0xff]
      %s408 = scalar_lea.vmem %s362, 146 [#allocation2]
      %v409 = vld [vmem:[%s408] ss:$2 sm:$0xff]
      %s410 = scalar_lea.vmem %s362, 194 [#allocation2]
      %v411 = vld [vmem:[%s410] ss:$2 sm:$0xff]
      %s412 = scalar_lea.vmem %s362, 242 [#allocation2]
      %v413 = vld [vmem:[%s412] ss:$2 sm:$0xff]
      %s414 = scalar_lea.vmem %s362, 290 [#allocation2]
      %v415 = vld [vmem:[%s414] ss:$2 sm:$0xff]
      %s416 = scalar_lea.vmem %s362, 338 [#allocation2]
      %v417 = vld [vmem:[%s416] ss:$2 sm:$0xff]
      %v418 = vmax.f32 %v394, %v403
      %v419 = vmax.f32 %v395, %v405
      %v420 = vmax.f32 %v396, %v407
      %v421 = vmax.f32 %v397, %v409
      %v422 = vmax.f32 %v398, %v411
      %v423 = vmax.f32 %v399, %v413
      %v424 = vmax.f32 %v400, %v415
      %v425 = vmax.f32 %v401, %v417
      %v426 = vmax.f32 %v290, %v354
      %v427 = vmax.f32 %v291, %v355
      %v428 = vmax.f32 %v292, %v356
      %v429 = vmax.f32 %v293, %v357
      %v430 = vmax.f32 %v294, %v358
      %v431 = vmax.f32 %v295, %v359
      %v432 = vmax.f32 %v296, %v360
      %v433 = vmax.f32 %v297, %v361
      %v434 = vmax.f32 %v426, %v418
      %v435 = vmax.f32 %v427, %v419
      %v436 = vmax.f32 %v428, %v420
      %v437 = vmax.f32 %v429, %v421
      %v438 = vmax.f32 %v430, %v422
      %v439 = vmax.f32 %v431, %v423
      %v440 = vmax.f32 %v432, %v424
      %v441 = vmax.f32 %v433, %v425
      %442 = vst.msk [vmem:[%s147] sm:$0xff] %vm149, %v434
      %443 = vst.msk [vmem:[%s147 + $0x8] sm:$0xff] %vm149, %v435
      %444 = vst.msk [vmem:[%s147 + $0x10] sm:$0xff] %vm149, %v436
      %445 = vst.msk [vmem:[%s147 + $0x18] sm:$0xff] %vm149, %v437
      %446 = vst.msk [vmem:[%s147 + $0x20] sm:$0xff] %vm149, %v438
      %447 = vst.msk [vmem:[%s147 + $0x28] sm:$0xff] %vm149, %v439
      %448 = vst.msk [vmem:[%s147 + $0x30] sm:$0xff] %vm149, %v440
      %449 = vst.msk [vmem:[%s147 + $0x38] sm:$0xff] %vm149, %v441
      %p450 = scmp.lt.s32.totalorder %s16, 1
      %s451 = scalar_select %p450, %s16, 1
      %p452 = scmp.lt.s32.totalorder %s17, 0
      %s453 = scalar_select %p452, %s17, 0
      %s454 = smul.addr %s451, 8
      %s455 = sadd.s32 %s453, %s454
      %s456 = smul.addr %s455, 8
      %s457 = scalar_lea.vmem %s1, %s456
      // Predicated region
      $region25: #{tpu_custom_call.1} parent=23 // pred_check
        %p458 = pneg %p72
      $region26: #{tpu_custom_call.1} parent=23 // pred_check_branch
        %460 = sbr.rel (%p458) target = $region28
      $region27: #{tpu_custom_call.1} parent=23 // pred_region
        _
      $region28: #{tpu_custom_call.1} parent=23 // pred_fallthru
        _
    $region24: #{tpu_custom_call.1} parent=5 // pred_fallthru
      _
    %p461 = scmp.le.s32.totalorder 2, %s7
    // Predicated region
    $region29: #{tpu_custom_call.1} parent=5 // pred_check
      %p462 = pneg %p461
    $region30: #{tpu_custom_call.1} parent=5 // pred_check_branch
      %464 = sbr.rel (%p462) target = $region32
    $region31: #{tpu_custom_call.1} parent=5 // pred_region
      %s465 = ssub.s32 %s7, 2
      // Predicated region
      $region33: #{tpu_custom_call.1} parent=31 // pred_check
        %p466 = pneg %p78
      $region34: #{tpu_custom_call.1} parent=31 // pred_check_branch
        %468 = sbr.rel (%p466) target = $region36
      $region35: #{tpu_custom_call.1} parent=31 // pred_region
        %p469 = scmp.lt.s32.totalorder %s18, 1
        %s470 = scalar_select %p469, %s18, 1
        %p471 = scmp.lt.s32.totalorder %s19, 0
        %s472 = scalar_select %p471, %s19, 0
        %s473 = smul.addr %s470, 8
        %s474 = sadd.s32 %s472, %s473
        %s475 = smul.addr %s474, 8
        %s476 = scalar_lea.vmem %s1, %s475
      $region36: #{tpu_custom_call.1} parent=31 // pred_fallthru
        _
    $region32: #{tpu_custom_call.1} parent=5 // pred_fallthru
      _
  $region6: #{tpu_custom_call.1} parent=0 // loop_footer
    %s11 = sadd.s32 1, %s7
  $region7: #{tpu_custom_call.1} parent=0 // loop_footer_branch
    %6 = sbr.rel target = $region3
  $region8: #{tpu_custom_call.1} parent=0 // loop_exit
    _

</llo_original>
